<compile_context>
chip_gen: v7x
topology: tpu7x:2x2x1
jax: 0.10.0
libtpu: 0.0.40
codegen_flags: <defaults>
</compile_context>

<pallas_src>
import functools
import math

import jax
import jax.numpy as jnp
from jax import lax
from jax.experimental import pallas as pl
from jax.experimental.pallas import tpu as pltpu

# dot_general dimension numbers contracting the LAST dim of both operands
# (the battle-tested "q @ k.T" pattern used by the TPU flash-attention kernels).
_TRANS_B_DIMS = (((1,), (1,)), ((), ()))


def _gaussian_full_kernel(x_ref, eye_ref, g_ref, o_ref, feats_ref, *, d):
    # x_ref: (tm, d) natural layout   eye_ref: (d, d)   g_ref: (N, F)
    # o_ref: (tm, N)                  feats_ref: VMEM scratch (F, tm)
    x = x_ref[...].astype(jnp.float32)                        # in-kernel cast (free VPU)

    # Batch -> lane transpose via an MXU dot against the identity: contracts
    # x's last dim, so no vector transpose of the unaligned (tm, 3) tile.
    xt = lax.dot_general(eye_ref[...], x, _TRANS_B_DIMS,
                         preferred_element_type=jnp.float32)  # (d, tm), lane-dense

    # Assemble monomial features phi(x) = [x_j^2, x_j x_k (j<k), x_j, 1] into
    # a VMEM scratch (plain sublane-slice stores; no concat/relayout needed).
    feats_ref[0:d, :] = xt * xt                               # x_j^2
    row = d
    for j in range(d):
        for k in range(j + 1, d):
            feats_ref[row:row + 1, :] = xt[j:j + 1, :] * xt[k:k + 1, :]   # x_j x_k
            row += 1
    feats_ref[row:row + d, :] = xt                            # x_j
    feats_ref[row + d:row + d + 1, :] = jnp.ones_like(xt[0:1, :])         # 1

    # One small MXU matmul produces all N log-densities, then a lane-dense exp.
    logits = jnp.dot(g_ref[...], feats_ref[...],
                     preferred_element_type=jnp.float32)      # (N, tm)
    act = jnp.exp(-0.5 * logits)                              # EUP, lane-dense

    # Lane -> sublane transpose on the XLU (aligned: N mult of 8, tm of 128) so
    # the block stores directly in the natural (m, N) output layout.
    # N < 128 makes this a masked store; it replaces a whole extra HBM pass.
    o_ref[...] = jnp.transpose(act).astype(o_ref.dtype)       # (tm, N)


def _round_up(x, mult):
    return ((x + mult - 1) // mult) * mult


def _fold_gaussian_constants(centers, sqrt_precision):
    """Fold centers + sqrt_precision into the (N, F) quadratic-form matrix G.

    Element-wise f32 ops only (no XLA dots), executed once per call.
    """
    p = sqrt_precision.astype(jnp.float32)                    # (d, d, N): P[i, j, n]
    c = centers.astype(jnp.float32)                           # (d, N)
    d = c.shape[0]
    a = jnp.sum(p[:, :, None, :] * p[:, None, :, :], axis=0)  # (d, d, N): (P^T P)[j,k,n]
    ac = jnp.sum(a * c[None, :, :], axis=1)                   # (d, N):   (A_n c_n)_j
    r = jnp.sum(c * ac, axis=0)                               # (N,):     c_n^T A_n c_n
    cols = [a[j, j, :] for j in range(d)]                     # x_j^2 coefficients
    for j in range(d):
        for k in range(j + 1, d):
            cols.append(2.0 * a[j, k, :])                     # x_j x_k coefficients
    cols.extend(-2.0 * ac[j, :] for j in range(d))            # x_j coefficients
    cols.append(r)                                            # constant term
    return jnp.stack(cols, axis=1)                            # (N, F), F = d(d+3)/2 + 1


def gaussian_kernel_forward(inputs, mask, centers, sqrt_precision, *, tm=16384):
    """inputs: (..., d)   centers: (d, N)   sqrt_precision: (d, d, N)."""
    *batch_dims, d = inputs.shape
    n = centers.shape[1]
    m = math.prod(batch_dims) if batch_dims else 1
    out_dtype = jnp.promote_types(inputs.dtype, jnp.float32)

    g = _fold_gaussian_constants(centers, sqrt_precision)     # (N, F), resident
    nfeat = g.shape[1]
    eye = jnp.eye(d, dtype=jnp.float32)                       # (d, d), resident

    # Row tile: multiple of 512 (sublane- and in-kernel-lane friendly), large by
    # default (~1 MiB of output per step) to amortise per-step overhead, capped
    # so the grid keeps >= 2 steps when m allows (v7x's two TensorCores, and
    # pipeline overlap everywhere).  VMEM stays ~7 MiB at tm=16384.
    # TODO(synk): if xprof still shows exposed DMA on v7x, add
    #             pipeline_mode=pl.Buffered(3) to the x/out specs (VMEM permits).
    granule = 512
    tm_cap = _round_up(max(int(tm), granule), granule)
    tm_eff = min(tm_cap, max(granule, _round_up(pl.cdiv(m, 2), granule)))
    num_tiles = pl.cdiv(m, tm_eff)

    x2d = inputs.reshape(m, d)                                # free collapse, no HBM pass

    kernel = functools.partial(_gaussian_full_kernel, d=d)
    activity2d = pl.pallas_call(
        kernel,
        out_shape=jax.ShapeDtypeStruct((m, n), out_dtype),
        grid_spec=pltpu.PrefetchScalarGridSpec(
            num_scalar_prefetch=0,
            grid=(num_tiles,),
            in_specs=[
                pl.BlockSpec((tm_eff, d), lambda i: (i, 0)),     # natural row blocks
                pl.BlockSpec((d, d), lambda i: (0, 0)),          # identity (resident)
                pl.BlockSpec((n, nfeat), lambda i: (0, 0)),      # folded constants
            ],
            out_specs=pl.BlockSpec((tm_eff, n), lambda i: (i, 0)),   # direct (m, N)
            scratch_shapes=[pltpu.VMEM((nfeat, tm_eff), jnp.float32)],
        ),
        compiler_params=pltpu.CompilerParams(
            dimension_semantics=("parallel",)),
    )(x2d, eye, g)

    activity = activity2d.reshape(*batch_dims, n)
    return activity, mask


def _reference_forward(inputs, mask, centers, sqrt_precision):
    """Pure-JAX mirror of the PyTorch 'full' branch (for validation)."""
    nbatch_dim = inputs.ndim - 1
    d, n = centers.shape
    c = centers.reshape((1,) * nbatch_dim + (d, n))
    intermediate = inputs[..., :, None] - c                          # [..., d, N]
    intermediate2 = jnp.sum(
        intermediate[..., None, :, :] * sqrt_precision[None, ...],   # [..., d, d, N]
        axis=-2)                                                     # [..., d, N]
    activity = jnp.exp(-0.5 * jnp.sum(intermediate2 ** 2, axis=-2))  # [..., N]
    return activity, mask


if __name__ == "__main__":
    # Module config: ndim=3 batch dims, feat_dim=3, N Gaussians, eps=0.1, 'full' cov.
    N = 16
    d = 3
    eps = 0.1
    b1, b2, b3 = 2, 4, 128     # flattened batch M = 1024 -> tm=512, 2-step parallel grid

    key = jax.random.PRNGKey(0)
    k_in, k_c, k_p, k_m = jax.random.split(key, 4)

    inputs = jax.random.normal(k_in, (b1, b2, b3, d), dtype=jnp.float32)
    mask = (jax.random.uniform(k_m, (b1, b2, b3)) > 0.5).astype(jnp.float32)

    # Deterministic "initial_values": centers (d, N) and sqrt_precision (d, d, N),
    # with the ConstraintBetween(-1/eps, 1/eps) clamp applied (glue, not hot path).
    centers = jax.random.normal(k_c, (d, N), dtype=jnp.float32)
    sqrt_precision = jax.random.normal(k_p, (d, d, N), dtype=jnp.float32)
    sqrt_precision = jnp.clip(sqrt_precision, -1.0 / eps, 1.0 / eps)

    activity, mask_out = gaussian_kernel_forward(inputs, mask, centers, sqrt_precision)
    activity = jax.block_until_ready(activity)

    ref_activity, _ = _reference_forward(inputs, mask, centers, sqrt_precision)
    assert activity.shape == (b1, b2, b3, N)
    assert activity.dtype == ref_activity.dtype
    # Quadratic-form reassociation (x^T A x - 2 c^T A x + c^T A c) vs the expanded
    # reference costs a few 1e-5 absolute in f32; activity lies in [0, 1].
    max_err = float(jnp.max(jnp.abs(activity - ref_activity)))
    assert jnp.allclose(activity, ref_activity, atol=2e-4, rtol=1e-4), max_err
    assert mask_out.shape == mask.shape

    # TODO(synk): 'diag' covariance branch not exercised here (module default is 'full').
    print("KERNEL_OK")
</pallas_src>

<mosaic_0001>
module attributes {stable_mosaic.version = 11 : i64} {
  func.func @_gaussian_full_kernel(%arg0: i32, %arg1: memref<512x3xf32, #tpu.memory_space<vmem>>, %arg2: memref<3x3xf32, #tpu.memory_space<vmem>>, %arg3: memref<16x10xf32, #tpu.memory_space<vmem>>, %arg4: memref<512x16xf32, #tpu.memory_space<vmem>>, %arg5: memref<10x512xf32, #tpu.memory_space<vmem>>) attributes {dimension_semantics = [#tpu.dimension_semantics<parallel>], iteration_bounds = array<i64: 2>, scalar_prefetch = 0 : i64, scratch_operands = 1 : i64, tpu.core_type = #tpu.core_type<tc>, window_params = [{transform_indices = @transform_0, window_bounds = array<i64: 512, 3>}, {pipeline_mode = #tpu.pipeline_mode<synchronous>, transform_indices = @transform_1, window_bounds = array<i64: 3, 3>}, {pipeline_mode = #tpu.pipeline_mode<synchronous>, transform_indices = @transform_2, window_bounds = array<i64: 16, 10>}, {transform_indices = @transform_3, window_bounds = array<i64: 512, 16>}]} {
    %c0 = arith.constant 0 : index
    %c0_0 = arith.constant 0 : index
    %0 = vector.load %arg1[%c0, %c0_0] : memref<512x3xf32, #tpu.memory_space<vmem>>, vector<512x3xf32>
    %c0_1 = arith.constant 0 : index
    %c0_2 = arith.constant 0 : index
    %1 = vector.load %arg2[%c0_1, %c0_2] : memref<3x3xf32, #tpu.memory_space<vmem>>, vector<3x3xf32>
    %cst = arith.constant dense<0.000000e+00> : vector<3x512xf32>
    %2 = tpu.matmul %1, %0, %cst {dimension_numbers = #tpu.dot_dimension_numbers<[1], [1], [0], [0], [0, 0, 1, 0], [], []>} : vector<3x3xf32>, vector<512x3xf32>, vector<3x512xf32> -> vector<3x512xf32>
    %3 = arith.mulf %2, %2 : vector<3x512xf32>
    %c0_3 = arith.constant 0 : index
    %c0_4 = arith.constant 0 : index
    %4 = vector.load %arg5[%c0_3, %c0_4] : memref<10x512xf32, #tpu.memory_space<vmem>>, vector<3x512xf32>
    tpu.vector_store %arg5[%c0_3, %c0_4], %3 {strides = array<i32>} : memref<10x512xf32, #tpu.memory_space<vmem>>, vector<3x512xf32>,
    %5 = vector.extract_strided_slice %2 {offsets = [0, 0], sizes = [1, 512], strides = [1, 1]} : vector<3x512xf32> to vector<1x512xf32>
    %6 = vector.extract_strided_slice %2 {offsets = [1, 0], sizes = [1, 512], strides = [1, 1]} : vector<3x512xf32> to vector<1x512xf32>
    %7 = arith.mulf %5, %6 : vector<1x512xf32>
    %c3 = arith.constant 3 : index
    %c0_5 = arith.constant 0 : index
    %8 = vector.load %arg5[%c3, %c0_5] : memref<10x512xf32, #tpu.memory_space<vmem>>, vector<1x512xf32>
    tpu.vector_store %arg5[%c3, %c0_5], %7 {strides = array<i32>} : memref<10x512xf32, #tpu.memory_space<vmem>>, vector<1x512xf32>,
    %9 = vector.extract_strided_slice %2 {offsets = [0, 0], sizes = [1, 512], strides = [1, 1]} : vector<3x512xf32> to vector<1x512xf32>
    %10 = vector.extract_strided_slice %2 {offsets = [2, 0], sizes = [1, 512], strides = [1, 1]} : vector<3x512xf32> to vector<1x512xf32>
    %11 = arith.mulf %9, %10 : vector<1x512xf32>
    %c4 = arith.constant 4 : index
    %c0_6 = arith.constant 0 : index
    %12 = vector.load %arg5[%c4, %c0_6] : memref<10x512xf32, #tpu.memory_space<vmem>>, vector<1x512xf32>
    tpu.vector_store %arg5[%c4, %c0_6], %11 {strides = array<i32>} : memref<10x512xf32, #tpu.memory_space<vmem>>, vector<1x512xf32>,
    %13 = vector.extract_strided_slice %2 {offsets = [1, 0], sizes = [1, 512], strides = [1, 1]} : vector<3x512xf32> to vector<1x512xf32>
    %14 = vector.extract_strided_slice %2 {offsets = [2, 0], sizes = [1, 512], strides = [1, 1]} : vector<3x512xf32> to vector<1x512xf32>
    %15 = arith.mulf %13, %14 : vector<1x512xf32>
    %c5 = arith.constant 5 : index
    %c0_7 = arith.constant 0 : index
    %16 = vector.load %arg5[%c5, %c0_7] : memref<10x512xf32, #tpu.memory_space<vmem>>, vector<1x512xf32>
    tpu.vector_store %arg5[%c5, %c0_7], %15 {strides = array<i32>} : memref<10x512xf32, #tpu.memory_space<vmem>>, vector<1x512xf32>,
    %c6 = arith.constant 6 : index
    %c0_8 = arith.constant 0 : index
    %17 = vector.load %arg5[%c6, %c0_8] : memref<10x512xf32, #tpu.memory_space<vmem>>, vector<3x512xf32>
    tpu.vector_store %arg5[%c6, %c0_8], %2 {strides = array<i32>} : memref<10x512xf32, #tpu.memory_space<vmem>>, vector<3x512xf32>,
    %cst_9 = arith.constant 1.000000e+00 : f32
    %18 = vector.broadcast %cst_9 : f32 to vector<1x512xf32>
    %c9 = arith.constant 9 : index
    %c0_10 = arith.constant 0 : index
    %19 = vector.load %arg5[%c9, %c0_10] : memref<10x512xf32, #tpu.memory_space<vmem>>, vector<1x512xf32>
    tpu.vector_store %arg5[%c9, %c0_10], %18 {strides = array<i32>} : memref<10x512xf32, #tpu.memory_space<vmem>>, vector<1x512xf32>,
    %c0_11 = arith.constant 0 : index
    %c0_12 = arith.constant 0 : index
    %20 = vector.load %arg3[%c0_11, %c0_12] : memref<16x10xf32, #tpu.memory_space<vmem>>, vector<16x10xf32>
    %c0_13 = arith.constant 0 : index
    %c0_14 = arith.constant 0 : index
    %21 = vector.load %arg5[%c0_13, %c0_14] : memref<10x512xf32, #tpu.memory_space<vmem>>, vector<10x512xf32>
    %cst_15 = arith.constant dense<0.000000e+00> : vector<16x512xf32>
    %22 = tpu.matmul %20, %21, %cst_15 {dimension_numbers = #tpu.dot_dimension_numbers<[1], [0], [0], [1], [0, 0, 1, 1], [], []>} : vector<16x10xf32>, vector<10x512xf32>, vector<16x512xf32> -> vector<16x512xf32>
    %cst_16 = arith.constant -5.000000e-01 : f32
    %23 = vector.broadcast %cst_16 : f32 to vector<16x512xf32>
    %24 = arith.mulf %23, %22 : vector<16x512xf32>
    %25 = math.exp %24 : vector<16x512xf32>
    %26 = tpu.transpose %25, [1, 0] : vector<16x512xf32> -> vector<512x16xf32>
    %c0_17 = arith.constant 0 : index
    %c0_18 = arith.constant 0 : index
    %27 = vector.load %arg4[%c0_17, %c0_18] : memref<512x16xf32, #tpu.memory_space<vmem>>, vector<512x16xf32>
    tpu.vector_store %arg4[%c0_17, %c0_18], %26 {strides = array<i32>} : memref<512x16xf32, #tpu.memory_space<vmem>>, vector<512x16xf32>,
    return
  }
  func.func @transform_0(%arg0: i32) -> (i32, i32) {
    %c0_i32 = arith.constant 0 : i32
    %c0_i32_0 = arith.constant 0 : i32
    return %arg0, %c0_i32 : i32, i32
  }
  func.func @transform_1(%arg0: i32) -> (i32, i32) {
    %c0_i32 = arith.constant 0 : i32
    %c0_i32_0 = arith.constant 0 : i32
    %c0_i32_1 = arith.constant 0 : i32
    return %c0_i32, %c0_i32_0 : i32, i32
  }
  func.func @transform_2(%arg0: i32) -> (i32, i32) {
    %c0_i32 = arith.constant 0 : i32
    %c0_i32_0 = arith.constant 0 : i32
    %c0_i32_1 = arith.constant 0 : i32
    return %c0_i32, %c0_i32_0 : i32, i32
  }
  func.func @transform_3(%arg0: i32) -> (i32, i32) {
    %c0_i32 = arith.constant 0 : i32
    %c0_i32_0 = arith.constant 0 : i32
    return %arg0, %c0_i32 : i32, i32
  }
}

</mosaic_0001>

<llo_original>
// kernel: tpu_custom_call.1
$region0: #{tpu_custom_call.1}
  #allocation0 [shape = 'u32[]', space=smem, size = 0x4, offset = 0x4, fixed_abs, tag = 'smem constant byte address 0x4 - core index']
  #allocation1 [shape = 'u32[144,128]{1,0:T(1,128)}', space=vmem, size = 0x12000, scoped, tag = 'internal scratch']
  #allocation2 [shape = 'f32[10,512]{1,0:T(8,128)}', space=vmem, size = 0x8000, scoped, tag = 'scratch operand']
  %s0 = inlined_call_operand.vmem [shape: f32[1024,3], index: 0, kind: input, shape index: {}]
  %s1 = inlined_call_operand.vmem [shape: f32[3,3], index: 1, kind: input, shape index: {}]
  %s2 = inlined_call_operand.vmem [shape: f32[16,10], index: 2, kind: input, shape index: {}]
  %s3 = inlined_call_operand.vmem [shape: f32[1024,16], index: 3, kind: output, shape index: {}]
  %s4 = sld [smem:[#allocation0]]
  $region45: #{tpu_custom_call.1} parent=0
    _
  %s6 = ssub.s32 1, %s4
  %s7 = scalar_select 0, %s6, %s4
  loop: start=0, step=1, limit=4
  $region2: #{tpu_custom_call.1} parent=0 // loop_pre_header
    _
  $region3: #{tpu_custom_call.1} parent=0 // loop_header
    %s9 = sphi 0, %s13
    %p10 = scmp.ge.s32.totalorder %s9, 4
    %s19 = sphi 0, %s21
    %s22 = sphi 0, %s19
    %s23 = sphi 0, %s22
    %s39 = sphi 0, %s23
    %s43 = sphi 0, %s43
    %s45 = sphi 0, %s43
    %s46 = sphi 0, %s45
    %s60 = sphi 0, %s46
    %s64 = sphi 0, %s64
    %s66 = sphi 0, %s64
    %s67 = sphi 0, %s66
    %s81 = sphi 0, %s67
    %s87 = sphi 0, %s89
    %s90 = sphi 0, %s87
    %s91 = sphi 0, %s90
    %s107 = sphi 0, %s91
  $region4: #{tpu_custom_call.1} parent=0 // loop_header_branch
    %12 = sbr.rel (%p10) target = $region8
  $region5: #{tpu_custom_call.1} parent=0 // loop_body
    %s14 = ssub.s32 %s9, 1
    %s15 = ssub.s32 %s9, 2
    %s16 = sadd.s32 %s9, 1
    %s17 = ssub.s32 %s9, %s16
    %p18 = scmp.eq.s32.totalorder %s17, 0
    %s20 = sadd.s32 %s19, 1
    %s21 = scalar_select %p18, %s19, %s20
    %p24 = pneg %p18
    %p25 = scmp.eq.s32.totalorder %s9, 1
    %p26 = por %p24, %p25
    %p27 = scmp.ne.s32.totalorder %s19, %s22
    %p28 = scmp.eq.s32.totalorder %s9, 0
    %p29 = por %p27, %p28
    %p30 = scmp.ne.s32.totalorder %s19, %s22
    %p31 = scmp.eq.s32.totalorder %s14, 1
    %p32 = por %p30, %p31
    %p33 = scmp.ne.s32.totalorder %s22, %s23
    %p34 = scmp.eq.s32.totalorder %s14, 0
    %p35 = por %p33, %p34
    %p36 = scmp.ne.s32.totalorder %s22, %s23
    %p37 = scmp.eq.s32.totalorder %s15, 1
    %p38 = por %p36, %p37
    %p40 = scmp.ne.s32.totalorder %s23, %s39
    %p41 = scmp.eq.s32.totalorder %s15, 0
    %p42 = por %p40, %p41
    %s44 = sadd.s32 %s43, 1
    %p47 = scmp.eq.s32.totalorder %s9, 1
    %p48 = scmp.ne.s32.totalorder %s43, %s45
    %p49 = scmp.eq.s32.totalorder %s9, 0
    %p50 = por %p48, %p49
    %p51 = scmp.ne.s32.totalorder %s43, %s45
    %p52 = scmp.eq.s32.totalorder %s14, 1
    %p53 = por %p51, %p52
    %p54 = scmp.ne.s32.totalorder %s45, %s46
    %p55 = scmp.eq.s32.totalorder %s14, 0
    %p56 = por %p54, %p55
    %p57 = scmp.ne.s32.totalorder %s45, %s46
    %p58 = scmp.eq.s32.totalorder %s15, 1
    %p59 = por %p57, %p58
    %p61 = scmp.ne.s32.totalorder %s46, %s60
    %p62 = scmp.eq.s32.totalorder %s15, 0
    %p63 = por %p61, %p62
    %s65 = sadd.s32 %s64, 1
    %p68 = scmp.eq.s32.totalorder %s9, 1
    %p69 = scmp.ne.s32.totalorder %s64, %s66
    %p70 = scmp.eq.s32.totalorder %s9, 0
    %p71 = por %p69, %p70
    %p72 = scmp.ne.s32.totalorder %s64, %s66
    %p73 = scmp.eq.s32.totalorder %s14, 1
    %p74 = por %p72, %p73
    %p75 = scmp.ne.s32.totalorder %s66, %s67
    %p76 = scmp.eq.s32.totalorder %s14, 0
    %p77 = por %p75, %p76
    %p78 = scmp.ne.s32.totalorder %s66, %s67
    %p79 = scmp.eq.s32.totalorder %s15, 1
    %p80 = por %p78, %p79
    %p82 = scmp.ne.s32.totalorder %s67, %s81
    %p83 = scmp.eq.s32.totalorder %s15, 0
    %p84 = por %p82, %p83
    %s85 = ssub.s32 %s9, %s16
    %p86 = scmp.eq.s32.totalorder %s85, 0
    %s88 = sadd.s32 %s87, 1
    %s89 = scalar_select %p86, %s87, %s88
    %p92 = pneg %p86
    %p93 = scmp.eq.s32.totalorder %s9, 1
    %p94 = por %p92, %p93
    %p95 = scmp.ne.s32.totalorder %s87, %s90
    %p96 = scmp.eq.s32.totalorder %s9, 0
    %p97 = por %p95, %p96
    %p98 = scmp.ne.s32.totalorder %s87, %s90
    %p99 = scmp.eq.s32.totalorder %s14, 1
    %p100 = por %p98, %p99
    %p101 = scmp.ne.s32.totalorder %s90, %s91
    %p102 = scmp.eq.s32.totalorder %s14, 0
    %p103 = por %p101, %p102
    %p104 = scmp.ne.s32.totalorder %s90, %s91
    %p105 = scmp.eq.s32.totalorder %s15, 1
    %p106 = por %p104, %p105
    %p108 = scmp.ne.s32.totalorder %s91, %s107
    %p109 = scmp.eq.s32.totalorder %s15, 0
    %p110 = por %p108, %p109
    %p111 = scmp.le.s32.totalorder 1, %s9
    %p112 = scmp.lt.s32.totalorder %s9, 3
    %p113 = pnand %p111, %p112
    %p114 = pneg %p113
    // Predicated region
    $region9: #{tpu_custom_call.1} parent=5 // pred_check
      _
    $region10: #{tpu_custom_call.1} parent=5 // pred_check_branch
      %116 = sbr.rel (%p113) target = $region12
    $region11: #{tpu_custom_call.1} parent=5 // pred_region
      %s117 = ssub.s32 %s9, 1
      // Predicated region
      $region13: #{tpu_custom_call.1} parent=11 // pred_check
        %p118 = pneg %p56
      $region14: #{tpu_custom_call.1} parent=11 // pred_check_branch
        %120 = sbr.rel (%p118) target = $region16
      $region15: #{tpu_custom_call.1} parent=11 // pred_region
        _
      $region16: #{tpu_custom_call.1} parent=11 // pred_fallthru
        _
      // Predicated region
      $region17: #{tpu_custom_call.1} parent=11 // pred_check
        %p121 = pneg %p77
      $region18: #{tpu_custom_call.1} parent=11 // pred_check_branch
        %123 = sbr.rel (%p121) target = $region20
      $region19: #{tpu_custom_call.1} parent=11 // pred_region
        _
      $region20: #{tpu_custom_call.1} parent=11 // pred_fallthru
        _
    $region12: #{tpu_custom_call.1} parent=5 // pred_fallthru
      _
    %p124 = scmp.lt.s32.totalorder %s9, 2
    // Predicated region
    $region21: #{tpu_custom_call.1} parent=5 // pred_check
      %p125 = pneg %p124
    $region22: #{tpu_custom_call.1} parent=5 // pred_check_branch
      %127 = sbr.rel (%p125) target = $region24
    $region23: #{tpu_custom_call.1} parent=5 // pred_region
      // Predicated region
      $region25: #{tpu_custom_call.1} parent=23 // pred_check
        %p128 = pneg %p29
      $region26: #{tpu_custom_call.1} parent=23 // pred_check_branch
        %130 = sbr.rel (%p128) target = $region28
      $region27: #{tpu_custom_call.1} parent=23 // pred_region
        %s131 = smul.u32 64, %s9
        %p132 = scmp.lt.s32.totalorder %s131, 127
        %s133 = scalar_select %p132, %s131, 127
        %s134 = smul.addr %s133, 8
        %s135 = scalar_lea.vmem %s0, %s134
        %s136 = smul.u32 64, %s9
      $region28: #{tpu_custom_call.1} parent=23 // pred_fallthru
        _
    $region24: #{tpu_custom_call.1} parent=5 // pred_fallthru
      _
    %p137 = scmp.le.s32.totalorder 1, %s9
    %p138 = scmp.lt.s32.totalorder %s9, 3
    %p139 = pnand %p137, %p138
    %p140 = pneg %p139
    // Predicated region
    $region29: #{tpu_custom_call.1} parent=5 // pred_check
      _
    $region30: #{tpu_custom_call.1} parent=5 // pred_check_branch
      %142 = sbr.rel (%p139) target = $region32
    $region31: #{tpu_custom_call.1} parent=5 // pred_region
      %s143 = ssub.s32 %s9, 1
      %s144 = smul.u32 64, %s14
      %p145 = scmp.lt.s32.totalorder %s144, 127
      %s146 = scalar_select %p145, %s144, 127
      %s147 = smul.addr %s146, 8
      %s148 = scalar_lea.vmem %s0, %s147
      %p149 = pneg %p35
      %p150 = pneg %p32
      %p151 = pneg %p56
      %p152 = pneg %p53
      %p153 = pneg %p77
      %p154 = pneg %p74
      %p155 = pneg %p103
      %p156 = pneg %p100
      %s157 = smul.u32 64, %s14
      %p158 = scmp.lt.s32.totalorder %s157, 127
      %s159 = scalar_select %p158, %s157, 127
      %s160 = smul.addr %s159, 8
      %s161 = scalar_lea.vmem %s3, %s160
      %s162 = smul.u32 64, %s14
      %p163 = scmp.lt.s32.totalorder %s162, 127
      %s164 = scalar_select %p163, %s162, 127
      %s165 = smul.addr %s164, 8
      %s166 = scalar_lea.vmem %s0, %s165
      %s167 = smul.u32 64, %s14
      %s168 = smul.u32 64, %s14
      %p169 = scmp.lt.s32.totalorder %s168, 127
      %s170 = scalar_select %p169, %s168, 127
      %s171 = smul.addr %s170, 8
      %s172 = scalar_lea.vmem %s3, %s171
      %s173 = smul.u32 64, %s14
      %v174 = vld [vmem:[%s166] sm:$0xff]
      %v175 = vld [vmem:[%s166 + $0x8] sm:$0xff]
      %v176 = vld [vmem:[%s166 + $0x10] sm:$0xff]
      %v177 = vld [vmem:[%s166 + $0x18] sm:$0xff]
      %v178 = vld [vmem:[%s166 + $0x20] sm:$0xff]
      %v179 = vld [vmem:[%s166 + $0x28] sm:$0xff]
      %v180 = vld [vmem:[%s166 + $0x30] sm:$0xff]
      %v181 = vld [vmem:[%s166 + $0x38] sm:$0xff]
      %v182 = vld [vmem:[%s166 + $0x40] sm:$0xff]
      %v183 = vld [vmem:[%s166 + $0x48] sm:$0xff]
      %v184 = vld [vmem:[%s166 + $0x50] sm:$0xff]
      %v185 = vld [vmem:[%s166 + $0x58] sm:$0xff]
      %v186 = vld [vmem:[%s166 + $0x60] sm:$0xff]
      %v187 = vld [vmem:[%s166 + $0x68] sm:$0xff]
      %v188 = vld [vmem:[%s166 + $0x70] sm:$0xff]
      %v189 = vld [vmem:[%s166 + $0x78] sm:$0xff]
      %v190 = vld [vmem:[%s166 + $0x80] sm:$0xff]
      %v191 = vld [vmem:[%s166 + $0x88] sm:$0xff]
      %v192 = vld [vmem:[%s166 + $0x90] sm:$0xff]
      %v193 = vld [vmem:[%s166 + $0x98] sm:$0xff]
      %v194 = vld [vmem:[%s166 + $0xa0] sm:$0xff]
      %v195 = vld [vmem:[%s166 + $0xa8] sm:$0xff]
      %v196 = vld [vmem:[%s166 + $0xb0] sm:$0xff]
      %v197 = vld [vmem:[%s166 + $0xb8] sm:$0xff]
      %v198 = vld [vmem:[%s166 + $0xc0] sm:$0xff]
      %v199 = vld [vmem:[%s166 + $0xc8] sm:$0xff]
      %v200 = vld [vmem:[%s166 + $0xd0] sm:$0xff]
      %v201 = vld [vmem:[%s166 + $0xd8] sm:$0xff]
      %v202 = vld [vmem:[%s166 + $0xe0] sm:$0xff]
      %v203 = vld [vmem:[%s166 + $0xe8] sm:$0xff]
      %v204 = vld [vmem:[%s166 + $0xf0] sm:$0xff]
      %v205 = vld [vmem:[%s166 + $0xf8] sm:$0xff]
      %v206 = vld [vmem:[%s166 + $0x100] sm:$0xff]
      %v207 = vld [vmem:[%s166 + $0x108] sm:$0xff]
      %v208 = vld [vmem:[%s166 + $0x110] sm:$0xff]
      %v209 = vld [vmem:[%s166 + $0x118] sm:$0xff]
      %v210 = vld [vmem:[%s166 + $0x120] sm:$0xff]
      %v211 = vld [vmem:[%s166 + $0x128] sm:$0xff]
      %v212 = vld [vmem:[%s166 + $0x130] sm:$0xff]
      %v213 = vld [vmem:[%s166 + $0x138] sm:$0xff]
      %v214 = vld [vmem:[%s166 + $0x140] sm:$0xff]
      %v215 = vld [vmem:[%s166 + $0x148] sm:$0xff]
      %v216 = vld [vmem:[%s166 + $0x150] sm:$0xff]
      %v217 = vld [vmem:[%s166 + $0x158] sm:$0xff]
      %v218 = vld [vmem:[%s166 + $0x160] sm:$0xff]
      %v219 = vld [vmem:[%s166 + $0x168] sm:$0xff]
      %v220 = vld [vmem:[%s166 + $0x170] sm:$0xff]
      %v221 = vld [vmem:[%s166 + $0x178] sm:$0xff]
      %v222 = vld [vmem:[%s166 + $0x180] sm:$0xff]
      %v223 = vld [vmem:[%s166 + $0x188] sm:$0xff]
      %v224 = vld [vmem:[%s166 + $0x190] sm:$0xff]
      %v225 = vld [vmem:[%s166 + $0x198] sm:$0xff]
      %v226 = vld [vmem:[%s166 + $0x1a0] sm:$0xff]
      %v227 = vld [vmem:[%s166 + $0x1a8] sm:$0xff]
      %v228 = vld [vmem:[%s166 + $0x1b0] sm:$0xff]
      %v229 = vld [vmem:[%s166 + $0x1b8] sm:$0xff]
      %v230 = vld [vmem:[%s166 + $0x1c0] sm:$0xff]
      %v231 = vld [vmem:[%s166 + $0x1c8] sm:$0xff]
      %v232 = vld [vmem:[%s166 + $0x1d0] sm:$0xff]
      %v233 = vld [vmem:[%s166 + $0x1d8] sm:$0xff]
      %v234 = vld [vmem:[%s166 + $0x1e0] sm:$0xff]
      %v235 = vld [vmem:[%s166 + $0x1e8] sm:$0xff]
      %v236 = vld [vmem:[%s166 + $0x1f0] sm:$0xff]
      %v237 = vld [vmem:[%s166 + $0x1f8] sm:$0xff]
      %v238 = vld [vmem:[%s1] sm:$0x7]
      %vm239 = vcmask 23552
      %v241 = vsel %vm239, %v238, 0
      %v244 = vsel %vm239, %v174, 0
      %v247 = vsel %vm239, %v175, 0
      %v250 = vsel %vm239, %v176, 0
      %v253 = vsel %vm239, %v177, 0
      %v256 = vsel %vm239, %v178, 0
      %v259 = vsel %vm239, %v179, 0
      %v262 = vsel %vm239, %v180, 0
      %v265 = vsel %vm239, %v181, 0
      %v268 = vsel %vm239, %v182, 0
      %v271 = vsel %vm239, %v183, 0
      %v274 = vsel %vm239, %v184, 0
      %v277 = vsel %vm239, %v185, 0
      %v280 = vsel %vm239, %v186, 0
      %v283 = vsel %vm239, %v187, 0
      %v286 = vsel %vm239, %v188, 0
      %v289 = vsel %vm239, %v189, 0
      %v292 = vsel %vm239, %v190, 0
      %v295 = vsel %vm239, %v191, 0
      %v298 = vsel %vm239, %v192, 0
      %v301 = vsel %vm239, %v193, 0
      %v304 = vsel %vm239, %v194, 0
      %v307 = vsel %vm239, %v195, 0
      %v310 = vsel %vm239, %v196, 0
      %v313 = vsel %vm239, %v197, 0
      %v316 = vsel %vm239, %v198, 0
      %v319 = vsel %vm239, %v199, 0
      %v322 = vsel %vm239, %v200, 0
      %v325 = vsel %vm239, %v201, 0
      %v328 = vsel %vm239, %v202, 0
      %v331 = vsel %vm239, %v203, 0
      %v334 = vsel %vm239, %v204, 0
      %v337 = vsel %vm239, %v205, 0
      %v340 = vsel %vm239, %v206, 0
      %v343 = vsel %vm239, %v207, 0
      %v346 = vsel %vm239, %v208, 0
      %v349 = vsel %vm239, %v209, 0
      %v352 = vsel %vm239, %v210, 0
      %v355 = vsel %vm239, %v211, 0
      %v358 = vsel %vm239, %v212, 0
      %v361 = vsel %vm239, %v213, 0
      %v364 = vsel %vm239, %v214, 0
      %v367 = vsel %vm239, %v215, 0
      %v370 = vsel %vm239, %v216, 0
      %v373 = vsel %vm239, %v217, 0
      %v376 = vsel %vm239, %v218, 0
      %v379 = vsel %vm239, %v219, 0
      %v382 = vsel %vm239, %v220, 0
      %v385 = vsel %vm239, %v221, 0
      %v388 = vsel %vm239, %v222, 0
      %v391 = vsel %vm239, %v223, 0
      %v394 = vsel %vm239, %v224, 0
      %v397 = vsel %vm239, %v225, 0
      %v400 = vsel %vm239, %v226, 0
      %v403 = vsel %vm239, %v227, 0
      %v406 = vsel %vm239, %v228, 0
      %v409 = vsel %vm239, %v229, 0
      %v412 = vsel %vm239, %v230, 0
      %v415 = vsel %vm239, %v231, 0
      %v418 = vsel %vm239, %v232, 0
      %v421 = vsel %vm239, %v233, 0
      %v424 = vsel %vm239, %v234, 0
      %v427 = vsel %vm239, %v235, 0
      %v430 = vsel %vm239, %v236, 0
      %v433 = vsel %vm239, %v237, 0
      %435 = vmatprep.subr.mxu0 0.0
      %436 = vmatpush1.xpose.msra.mxu0 %v244
      %437 = vmatprep.subr.mxu0 0.0
      %438 = vmatpush1.xpose.msra.mxu0 %v247
      %439 = vmatprep.subr.mxu0 0.0
      %440 = vmatpush1.xpose.msra.mxu0 %v250
      %441 = vmatprep.subr.mxu0 0.0
      %442 = vmatpush1.xpose.msra.mxu0 %v253
      %443 = vmatprep.subr.mxu0 0.0
      %444 = vmatpush1.xpose.msra.mxu0 %v256
      %445 = vmatprep.subr.mxu0 0.0
      %446 = vmatpush1.xpose.msra.mxu0 %v259
      %447 = vmatprep.subr.mxu0 0.0
      %448 = vmatpush1.xpose.msra.mxu0 %v262
      %449 = vmatprep.subr.mxu0 0.0
      %450 = vmatpush1.xpose.msra.mxu0 %v265
      %451 = vmatprep.subr.mxu0 0.0
      %452 = vmatpush1.xpose.msra.mxu0 %v268
      %453 = vmatprep.subr.mxu0 0.0
      %454 = vmatpush1.xpose.msra.mxu0 %v271
      %455 = vmatprep.subr.mxu0 0.0
      %456 = vmatpush1.xpose.msra.mxu0 %v274
      %457 = vmatprep.subr.mxu0 0.0
      %458 = vmatpush1.xpose.msra.mxu0 %v277
      %459 = vmatprep.subr.mxu0 0.0
      %460 = vmatpush1.xpose.msra.mxu0 %v280
      %461 = vmatprep.subr.mxu0 0.0
      %462 = vmatpush1.xpose.msra.mxu0 %v283
      %463 = vmatprep.subr.mxu0 0.0
      %464 = vmatpush1.xpose.msra.mxu0 %v286
      %465 = vmatprep.subr.mxu0 0.0
      %466 = vmatpush1.xpose.msra.mxu0 %v289
      %467 = vmatprep.subr.mxu0 0.0
      %468 = vmatpush1.xpose.msra.mxu0 %v292
      %469 = vmatprep.subr.mxu0 0.0
      %470 = vmatpush1.xpose.msra.mxu0 %v295
      %471 = vmatprep.subr.mxu0 0.0
      %472 = vmatpush1.xpose.msra.mxu0 %v298
      %473 = vmatprep.subr.mxu0 0.0
      %474 = vmatpush1.xpose.msra.mxu0 %v301
      %475 = vmatprep.subr.mxu0 0.0
      %476 = vmatpush1.xpose.msra.mxu0 %v304
      %477 = vmatprep.subr.mxu0 0.0
      %478 = vmatpush1.xpose.msra.mxu0 %v307
      %479 = vmatprep.subr.mxu0 0.0
      %480 = vmatpush1.xpose.msra.mxu0 %v310
      %481 = vmatprep.subr.mxu0 0.0
      %482 = vmatpush1.xpose.msra.mxu0 %v313
      %483 = vmatprep.subr.mxu0 0.0
      %484 = vmatpush1.xpose.msra.mxu0 %v316
      %485 = vmatprep.subr.mxu0 0.0
      %486 = vmatpush1.xpose.msra.mxu0 %v319
      %487 = vmatprep.subr.mxu0 0.0
      %488 = vmatpush1.xpose.msra.mxu0 %v322
      %489 = vmatprep.subr.mxu0 0.0
      %490 = vmatpush1.xpose.msra.mxu0 %v325
      %491 = vmatprep.subr.mxu0 0.0
      %492 = vmatpush1.xpose.msra.mxu0 %v328
      %493 = vmatprep.subr.mxu0 0.0
      %494 = vmatpush1.xpose.msra.mxu0 %v331
      %495 = vmatprep.subr.mxu0 0.0
      %496 = vmatpush1.xpose.msra.mxu0 %v334
      %497 = vmatprep.subr.mxu0 0.0
      %498 = vmatpush1.xpose.msra.mxu0 %v337
      %499 = vmatprep.mubr.f32.mxu0 0.0
      %500 = vmatmul.mubr.f32.gmra.mrb[0].mxu0 %v241
      %v501 = vpop.f32.mrb[0].mxu0
      %v502 = vadd.f32 0.0, %v501
      %v503 = vpop.f32.mrb[0].mxu0
      %v504 = vadd.f32 0.0, %v503
      %505 = vdwg.mxu0
      %506 = vmatprep.subr.mxu0 0.0
      %507 = vmatpush1.xpose.msra.mxu0 %v340
      %508 = vmatprep.subr.mxu0 0.0
      %509 = vmatpush1.xpose.msra.mxu0 %v343
      %510 = vmatprep.subr.mxu0 0.0
      %511 = vmatpush1.xpose.msra.mxu0 %v346
      %512 = vmatprep.subr.mxu0 0.0
      %513 = vmatpush1.xpose.msra.mxu0 %v349
      %514 = vmatprep.subr.mxu0 0.0
      %515 = vmatpush1.xpose.msra.mxu0 %v352
      %516 = vmatprep.subr.mxu0 0.0
      %517 = vmatpush1.xpose.msra.mxu0 %v355
      %518 = vmatprep.subr.mxu0 0.0
      %519 = vmatpush1.xpose.msra.mxu0 %v358
      %520 = vmatprep.subr.mxu0 0.0
      %521 = vmatpush1.xpose.msra.mxu0 %v361
      %522 = vmatprep.subr.mxu0 0.0
      %523 = vmatpush1.xpose.msra.mxu0 %v364
      %524 = vmatprep.subr.mxu0 0.0
      %525 = vmatpush1.xpose.msra.mxu0 %v367
      %526 = vmatprep.subr.mxu0 0.0
      %527 = vmatpush1.xpose.msra.mxu0 %v370
      %528 = vmatprep.subr.mxu0 0.0
      %529 = vmatpush1.xpose.msra.mxu0 %v373
      %530 = vmatprep.subr.mxu0 0.0
      %531 = vmatpush1.xpose.msra.mxu0 %v376
      %532 = vmatprep.subr.mxu0 0.0
      %533 = vmatpush1.xpose.msra.mxu0 %v379
      %534 = vmatprep.subr.mxu0 0.0
      %535 = vmatpush1.xpose.msra.mxu0 %v382
      %536 = vmatprep.subr.mxu0 0.0
      %537 = vmatpush1.xpose.msra.mxu0 %v385
      %538 = vmatprep.subr.mxu0 0.0
      %539 = vmatpush1.xpose.msra.mxu0 %v388
      %540 = vmatprep.subr.mxu0 0.0
      %541 = vmatpush1.xpose.msra.mxu0 %v391
      %542 = vmatprep.subr.mxu0 0.0
      %543 = vmatpush1.xpose.msra.mxu0 %v394
      %544 = vmatprep.subr.mxu0 0.0
      %545 = vmatpush1.xpose.msra.mxu0 %v397
      %546 = vmatprep.subr.mxu0 0.0
      %547 = vmatpush1.xpose.msra.mxu0 %v400
      %548 = vmatprep.subr.mxu0 0.0
      %549 = vmatpush1.xpose.msra.mxu0 %v403
      %550 = vmatprep.subr.mxu0 0.0
      %551 = vmatpush1.xpose.msra.mxu0 %v406
      %552 = vmatprep.subr.mxu0 0.0
      %553 = vmatpush1.xpose.msra.mxu0 %v409
      %554 = vmatprep.subr.mxu0 0.0
      %555 = vmatpush1.xpose.msra.mxu0 %v412
      %556 = vmatprep.subr.mxu0 0.0
      %557 = vmatpush1.xpose.msra.mxu0 %v415
      %558 = vmatprep.subr.mxu0 0.0
      %559 = vmatpush1.xpose.msra.mxu0 %v418
      %560 = vmatprep.subr.mxu0 0.0
      %561 = vmatpush1.xpose.msra.mxu0 %v421
      %562 = vmatprep.subr.mxu0 0.0
      %563 = vmatpush1.xpose.msra.mxu0 %v424
      %564 = vmatprep.subr.mxu0 0.0
      %565 = vmatpush1.xpose.msra.mxu0 %v427
      %566 = vmatprep.subr.mxu0 0.0
      %567 = vmatpush1.xpose.msra.mxu0 %v430
      %568 = vmatprep.subr.mxu0 0.0
      %569 = vmatpush1.xpose.msra.mxu0 %v433
      %570 = vmatprep.mubr.f32.mxu0 0.0
      %571 = vmatmul.mubr.f32.gmra.mrb[0].mxu0 %v241
      %v572 = vpop.f32.mrb[0].mxu0
      %v573 = vadd.f32 0.0, %v572
      %v574 = vpop.f32.mrb[0].mxu0
      %v575 = vadd.f32 0.0, %v574
      %576 = vdwg.mxu0
      %v577 = vmul.f32 %v502, %v502
      %v578 = vmul.f32 %v504, %v504
      %v579 = vmul.f32 %v573, %v573
      %v580 = vmul.f32 %v575, %v575
      %581 = vst [vmem:[#allocation2] sm:$0x7] %v577
      %582 = vst [vmem:[#allocation2 + $0x8] sm:$0x7] %v578
      %583 = vst [vmem:[#allocation2 + $0x10] sm:$0x7] %v579
      %584 = vst [vmem:[#allocation2 + $0x18] sm:$0x7] %v580
      %v589 = vrot.slane %v502, 1
      %v590 = vrot.slane %v504, 1
      %v591 = vrot.slane %v573, 1
      %v592 = vrot.slane %v575, 1
      %v597 = vmul.f32 %v502, %v589
      %v598 = vmul.f32 %v504, %v590
      %v599 = vmul.f32 %v573, %v591
      %v600 = vmul.f32 %v575, %v592
      %v605 = vcombine.low %v597, %v598
      %v606 = vcombine.low %v599, %v600
      %v608 = vunpack.c.l.s4 1966171168
      %v609 = vunpack.c.0.s8 %v608
      %v610 = vlaneseq
      %v611 = vshrl.u32 %v610, 7
      %v612 = vsub.s32 %v609, %v611
      %v613 = vrot.slane %v605, %v612
      %v615 = vunpack.c.l.s4 1966171168
      %v616 = vunpack.c.0.s8 %v615
      %v617 = vlaneseq
      %v618 = vshrl.u32 %v617, 7
      %v619 = vsub.s32 %v616, %v618
      %v620 = vrot.slane %v606, %v619
      %v621 = vcombine.low %v613, %v620
      %v623 = vunpack.c.l.s4 1966171168
      %v624 = vunpack.c.0.s8 %v623
      %v625 = vlaneseq
      %v626 = vshrl.u32 %v625, 7
      %v627 = vsub.s32 %v624, %v626
      %v628 = vrot.slane %v621, %v627
      %v630 = vlaneseq
      %vm631 = vcmp.ge.s32.totalorder %v630, 0
      %vm632 = vcmp.lt.s32.totalorder %v630, 512
      %vm633 = vmand %vm631, %vm632
      %s634 = scalar_lea.vmem [#allocation2], 3
      %635 = vst.msk [vmem:[%s634] ss:$8 sm:$0xf] %vm633, %v628
      %636 = vst.msk [vmem:[%s634] ss:$8 sm:$0x0] %vm633, %v628
      %v637 = vrot.slane %v502, 2
      %v638 = vrot.slane %v504, 2
      %v639 = vrot.slane %v573, 2
      %v640 = vrot.slane %v575, 2
      %v645 = vmul.f32 %v502, %v637
      %v646 = vmul.f32 %v504, %v638
      %v647 = vmul.f32 %v573, %v639
      %v648 = vmul.f32 %v575, %v640
      %v653 = vcombine.low %v645, %v646
      %v654 = vcombine.low %v647, %v648
      %v656 = vunpack.c.l.s4 1966171168
      %v657 = vunpack.c.0.s8 %v656
      %v658 = vlaneseq
      %v659 = vshrl.u32 %v658, 7
      %v660 = vsub.s32 %v657, %v659
      %v661 = vrot.slane %v653, %v660
      %v663 = vunpack.c.l.s4 1966171168
      %v664 = vunpack.c.0.s8 %v663
      %v665 = vlaneseq
      %v666 = vshrl.u32 %v665, 7
      %v667 = vsub.s32 %v664, %v666
      %v668 = vrot.slane %v654, %v667
      %v669 = vcombine.low %v661, %v668
      %v671 = vunpack.c.l.s4 1966171168
      %v672 = vunpack.c.0.s8 %v671
      %v673 = vlaneseq
      %v674 = vshrl.u32 %v673, 7
      %v675 = vsub.s32 %v672, %v674
      %v676 = vrot.slane %v669, %v675
      %s678 = scalar_lea.vmem [#allocation2], 4
      %679 = vst.msk [vmem:[%s678] ss:$8 sm:$0xf] %vm633, %v676
      %680 = vst.msk [vmem:[%s678] ss:$8 sm:$0x0] %vm633, %v676
      %v681 = vcombine.high %v613, %v620
      %v683 = vunpack.c.l.s4 1966171168
      %v684 = vunpack.c.0.s8 %v683
      %v685 = vlaneseq
      %v686 = vshrl.u32 %v685, 7
      %v687 = vsub.s32 %v684, %v686
      %v688 = vrot.slane %v681, %v687
      %s690 = scalar_lea.vmem [#allocation2], 5
      %691 = vst.msk [vmem:[%s690] ss:$8 sm:$0xf] %vm633, %v688
      %692 = vst.msk [vmem:[%s690] ss:$8 sm:$0x0] %vm633, %v688
      %693 = vst [vmem:[#allocation2] sm:$0xc0] %v637
      %694 = vst [vmem:[#allocation2 + $0x8] sm:$0xc0] %v638
      %695 = vst [vmem:[#allocation2 + $0x10] sm:$0xc0] %v639
      %696 = vst [vmem:[#allocation2 + $0x18] sm:$0xc0] %v640
      %697 = vst [vmem:[#allocation2 + $0x20] sm:$0x1] %v637
      %698 = vst [vmem:[#allocation2 + $0x28] sm:$0x1] %v638
      %699 = vst [vmem:[#allocation2 + $0x30] sm:$0x1] %v639
      %700 = vst [vmem:[#allocation2 + $0x38] sm:$0x1] %v640
      %s701 = scalar_lea.vmem [#allocation2], 33
      %702 = vst.msk [vmem:[%s701] ss:$8 sm:$0xf] %vm633, 1.0
      %703 = vst.msk [vmem:[%s701] ss:$8 sm:$0x0] %vm633, 1.0
      %v704 = vld [vmem:[%s2] sm:$0xff]
      %v705 = vld [vmem:[%s2 + $0x8] sm:$0xff]
      %v706 = vld [vmem:[#allocation2] sm:$0xff]
      %v707 = vld [vmem:[#allocation2 + $0x8] sm:$0xff]
      %v708 = vld [vmem:[#allocation2 + $0x10] sm:$0xff]
      %v709 = vld [vmem:[#allocation2 + $0x18] sm:$0xff]
      %v710 = vld [vmem:[#allocation2 + $0x20] sm:$0x3]
      %v711 = vld [vmem:[#allocation2 + $0x28] sm:$0x3]
      %v712 = vld [vmem:[#allocation2 + $0x30] sm:$0x3]
      %v713 = vld [vmem:[#allocation2 + $0x38] sm:$0x3]
      %vm714 = vcmask 80896
      %v716 = vsel %vm714, %v704, 0
      %v719 = vsel %vm714, %v705, 0
      %vm721 = vcmask 1041408
      %v723 = vsel %vm721, %v710, 0
      %v726 = vsel %vm721, %v711, 0
      %v729 = vsel %vm721, %v712, 0
      %v732 = vsel %vm721, %v713, 0
      %734 = vmatprep.subr.mxu0 %v707
      %735 = vmatpush1.msra.mxu0 %v706
      %736 = vmatprep.subr.mxu0 %v726
      %737 = vmatpush1.msra.mxu0 %v723
      %738 = vmatprep.subr.mxu0 0.0
      %739 = vmatpush1.msra.mxu0 0.0
      %740 = vmatprep.subr.mxu0 0.0
      %741 = vmatpush1.msra.mxu0 0.0
      %742 = vmatprep.subr.mxu0 0.0
      %743 = vmatpush1.msra.mxu0 0.0
      %744 = vmatprep.subr.mxu0 0.0
      %745 = vmatpush1.msra.mxu0 0.0
      %746 = vmatprep.subr.mxu0 0.0
      %747 = vmatpush1.msra.mxu0 0.0
      %748 = vmatprep.subr.mxu0 0.0
      %749 = vmatpush1.msra.mxu0 0.0
      %750 = vmatprep.subr.mxu0 0.0
      %751 = vmatpush1.msra.mxu0 0.0
      %752 = vmatprep.subr.mxu0 0.0
      %753 = vmatpush1.msra.mxu0 0.0
      %754 = vmatprep.subr.mxu0 0.0
      %755 = vmatpush1.msra.mxu0 0.0
      %756 = vmatprep.subr.mxu0 0.0
      %757 = vmatpush1.msra.mxu0 0.0
      %758 = vmatprep.subr.mxu0 0.0
      %759 = vmatpush1.msra.mxu0 0.0
      %760 = vmatprep.subr.mxu0 0.0
      %761 = vmatpush1.msra.mxu0 0.0
      %762 = vmatprep.subr.mxu0 0.0
      %763 = vmatpush1.msra.mxu0 0.0
      %764 = vmatprep.subr.mxu0 0.0
      %765 = vmatpush1.msra.mxu0 0.0
      %766 = vmatprep.subr.mxu0 0.0
      %767 = vmatpush1.msra.mxu0 0.0
      %768 = vmatprep.subr.mxu0 0.0
      %769 = vmatpush1.msra.mxu0 0.0
      %770 = vmatprep.subr.mxu0 0.0
      %771 = vmatpush1.msra.mxu0 0.0
      %772 = vmatprep.subr.mxu0 0.0
      %773 = vmatpush1.msra.mxu0 0.0
      %774 = vmatprep.subr.mxu0 0.0
      %775 = vmatpush1.msra.mxu0 0.0
      %776 = vmatprep.subr.mxu0 0.0
      %777 = vmatpush1.msra.mxu0 0.0
      %778 = vmatprep.subr.mxu0 0.0
      %779 = vmatpush1.msra.mxu0 0.0
      %780 = vmatprep.subr.mxu0 0.0
      %781 = vmatpush1.msra.mxu0 0.0
      %782 = vmatprep.subr.mxu0 0.0
      %783 = vmatpush1.msra.mxu0 0.0
      %784 = vmatprep.subr.mxu0 0.0
      %785 = vmatpush1.msra.mxu0 0.0
      %786 = vmatprep.subr.mxu0 0.0
      %787 = vmatpush1.msra.mxu0 0.0
      %788 = vmatprep.subr.mxu0 0.0
      %789 = vmatpush1.msra.mxu0 0.0
      %790 = vmatprep.subr.mxu0 0.0
      %791 = vmatpush1.msra.mxu0 0.0
      %792 = vmatprep.subr.mxu0 0.0
      %793 = vmatpush1.msra.mxu0 0.0
      %794 = vmatprep.subr.mxu0 0.0
      %795 = vmatpush1.msra.mxu0 0.0
      %796 = vmatprep.subr.mxu0 0.0
      %797 = vmatpush1.msra.mxu0 0.0
      %798 = vmatprep.mubr.f32.mxu0 0.0
      %799 = vmatmul.mubr.f32.gmra.mrb[0].mxu0 %v716
      %v800 = vpop.f32.mrb[0].mxu0
      %v801 = vadd.f32 0.0, %v800
      %v802 = vpop.f32.mrb[0].mxu0
      %v803 = vadd.f32 0.0, %v802
      %804 = vmatprep.mubr.f32.mxu0 0.0
      %805 = vmatmul.mubr.f32.gmra.mrb[0].mxu0 %v719
      %v806 = vpop.f32.mrb[0].mxu0
      %v807 = vadd.f32 0.0, %v806
      %v808 = vpop.f32.mrb[0].mxu0
      %v809 = vadd.f32 0.0, %v808
      %810 = vdwg.mxu0
      %811 = vmatprep.subr.mxu0 %v709
      %812 = vmatpush1.msra.mxu0 %v708
      %813 = vmatprep.subr.mxu0 %v732
      %814 = vmatpush1.msra.mxu0 %v729
      %815 = vmatprep.subr.mxu0 0.0
      %816 = vmatpush1.msra.mxu0 0.0
      %817 = vmatprep.subr.mxu0 0.0
      %818 = vmatpush1.msra.mxu0 0.0
      %819 = vmatprep.subr.mxu0 0.0
      %820 = vmatpush1.msra.mxu0 0.0
      %821 = vmatprep.subr.mxu0 0.0
      %822 = vmatpush1.msra.mxu0 0.0
      %823 = vmatprep.subr.mxu0 0.0
      %824 = vmatpush1.msra.mxu0 0.0
      %825 = vmatprep.subr.mxu0 0.0
      %826 = vmatpush1.msra.mxu0 0.0
      %827 = vmatprep.subr.mxu0 0.0
      %828 = vmatpush1.msra.mxu0 0.0
      %829 = vmatprep.subr.mxu0 0.0
      %830 = vmatpush1.msra.mxu0 0.0
      %831 = vmatprep.subr.mxu0 0.0
      %832 = vmatpush1.msra.mxu0 0.0
      %833 = vmatprep.subr.mxu0 0.0
      %834 = vmatpush1.msra.mxu0 0.0
      %835 = vmatprep.subr.mxu0 0.0
      %836 = vmatpush1.msra.mxu0 0.0
      %837 = vmatprep.subr.mxu0 0.0
      %838 = vmatpush1.msra.mxu0 0.0
      %839 = vmatprep.subr.mxu0 0.0
      %840 = vmatpush1.msra.mxu0 0.0
      %841 = vmatprep.subr.mxu0 0.0
      %842 = vmatpush1.msra.mxu0 0.0
      %843 = vmatprep.subr.mxu0 0.0
      %844 = vmatpush1.msra.mxu0 0.0
      %845 = vmatprep.subr.mxu0 0.0
      %846 = vmatpush1.msra.mxu0 0.0
      %847 = vmatprep.subr.mxu0 0.0
      %848 = vmatpush1.msra.mxu0 0.0
      %849 = vmatprep.subr.mxu0 0.0
      %850 = vmatpush1.msra.mxu0 0.0
      %851 = vmatprep.subr.mxu0 0.0
      %852 = vmatpush1.msra.mxu0 0.0
      %853 = vmatprep.subr.mxu0 0.0
      %854 = vmatpush1.msra.mxu0 0.0
      %855 = vmatprep.subr.mxu0 0.0
      %856 = vmatpush1.msra.mxu0 0.0
      %857 = vmatprep.subr.mxu0 0.0
      %858 = vmatpush1.msra.mxu0 0.0
      %859 = vmatprep.subr.mxu0 0.0
      %860 = vmatpush1.msra.mxu0 0.0
      %861 = vmatprep.subr.mxu0 0.0
      %862 = vmatpush1.msra.mxu0 0.0
      %863 = vmatprep.subr.mxu0 0.0
      %864 = vmatpush1.msra.mxu0 0.0
      %865 = vmatprep.subr.mxu0 0.0
      %866 = vmatpush1.msra.mxu0 0.0
      %867 = vmatprep.subr.mxu0 0.0
      %868 = vmatpush1.msra.mxu0 0.0
      %869 = vmatprep.subr.mxu0 0.0
      %870 = vmatpush1.msra.mxu0 0.0
      %871 = vmatprep.subr.mxu0 0.0
      %872 = vmatpush1.msra.mxu0 0.0
      %873 = vmatprep.subr.mxu0 0.0
      %874 = vmatpush1.msra.mxu0 0.0
      %875 = vmatprep.mubr.f32.mxu0 0.0
      %876 = vmatmul.mubr.f32.gmra.mrb[0].mxu0 %v716
      %v877 = vpop.f32.mrb[0].mxu0
      %v878 = vadd.f32 0.0, %v877
      %v879 = vpop.f32.mrb[0].mxu0
      %v880 = vadd.f32 0.0, %v879
      %881 = vmatprep.mubr.f32.mxu0 0.0
      %882 = vmatmul.mubr.f32.gmra.mrb[0].mxu0 %v719
      %v883 = vpop.f32.mrb[0].mxu0
      %v884 = vadd.f32 0.0, %v883
      %v885 = vpop.f32.mrb[0].mxu0
      %v886 = vadd.f32 0.0, %v885
      %887 = vdwg.mxu0
      %v888 = vmul.f32 %v801, -0.5
      %v889 = vmul.f32 %v803, -0.5
      %v890 = vmul.f32 %v878, -0.5
      %v891 = vmul.f32 %v880, -0.5
      %v892 = vmul.f32 %v807, -0.5
      %v893 = vmul.f32 %v809, -0.5
      %v894 = vmul.f32 %v884, -0.5
      %v895 = vmul.f32 %v886, -0.5
      %v896 = vmul.f32 %v888, 1.442695
      %v897 = vpow.pop %v896
      %v898 = vmul.f32 %v889, 1.442695
      %v899 = vpow.pop %v898
      %v900 = vmul.f32 %v890, 1.442695
      %v901 = vpow.pop %v900
      %v902 = vmul.f32 %v891, 1.442695
      %v903 = vpow.pop %v902
      %v904 = vmul.f32 %v892, 1.442695
      %v905 = vpow.pop %v904
      %v906 = vmul.f32 %v893, 1.442695
      %v907 = vpow.pop %v906
      %v908 = vmul.f32 %v894, 1.442695
      %v909 = vpow.pop %v908
      %v910 = vmul.f32 %v895, 1.442695
      %v911 = vpow.pop %v910
      %912 = vxpose.xlu0.b32.start [1/16] %v897, 128
      %913 = vxpose.xlu0.b32.cont [2/16] %v905, 128
      %914 = vxpose.xlu0.b32.cont [3/16] 0.0, 128
      %915 = vxpose.xlu0.b32.cont [4/16] 0.0, 128
      %916 = vxpose.xlu0.b32.cont [5/16] 0.0, 128
      %917 = vxpose.xlu0.b32.cont [6/16] 0.0, 128
      %918 = vxpose.xlu0.b32.cont [7/16] 0.0, 128
      %919 = vxpose.xlu0.b32.cont [8/16] 0.0, 128
      %920 = vxpose.xlu0.b32.cont [9/16] 0.0, 128
      %921 = vxpose.xlu0.b32.cont [10/16] 0.0, 128
      %922 = vxpose.xlu0.b32.cont [11/16] 0.0, 128
      %923 = vxpose.xlu0.b32.cont [12/16] 0.0, 128
      %924 = vxpose.xlu0.b32.cont [13/16] 0.0, 128
      %925 = vxpose.xlu0.b32.cont [14/16] 0.0, 128
      %926 = vxpose.xlu0.b32.cont [15/16] 0.0, 128
      %927 = vxpose.xlu0.b32.end [16/16] 0.0, 128
      %v928 = vpop.trf.xlu0
      %v929 = vpop.trf.xlu0
      %v930 = vpop.trf.xlu0
      %v931 = vpop.trf.xlu0
      %v932 = vpop.trf.xlu0
      %v933 = vpop.trf.xlu0
      %v934 = vpop.trf.xlu0
      %v935 = vpop.trf.xlu0
      %v936 = vpop.trf.xlu0
      %v937 = vpop.trf.xlu0
      %v938 = vpop.trf.xlu0
      %v939 = vpop.trf.xlu0
      %v940 = vpop.trf.xlu0
      %v941 = vpop.trf.xlu0
      %v942 = vpop.trf.xlu0
      %v943 = vpop.trf.xlu0
      %944 = vxpose.xlu0.b32.start [1/16] %v899, 128
      %945 = vxpose.xlu0.b32.cont [2/16] %v907, 128
      %946 = vxpose.xlu0.b32.cont [3/16] 0.0, 128
      %947 = vxpose.xlu0.b32.cont [4/16] 0.0, 128
      %948 = vxpose.xlu0.b32.cont [5/16] 0.0, 128
      %949 = vxpose.xlu0.b32.cont [6/16] 0.0, 128
      %950 = vxpose.xlu0.b32.cont [7/16] 0.0, 128
      %951 = vxpose.xlu0.b32.cont [8/16] 0.0, 128
      %952 = vxpose.xlu0.b32.cont [9/16] 0.0, 128
      %953 = vxpose.xlu0.b32.cont [10/16] 0.0, 128
      %954 = vxpose.xlu0.b32.cont [11/16] 0.0, 128
      %955 = vxpose.xlu0.b32.cont [12/16] 0.0, 128
      %956 = vxpose.xlu0.b32.cont [13/16] 0.0, 128
      %957 = vxpose.xlu0.b32.cont [14/16] 0.0, 128
      %958 = vxpose.xlu0.b32.cont [15/16] 0.0, 128
      %959 = vxpose.xlu0.b32.end [16/16] 0.0, 128
      %v960 = vpop.trf.xlu0
      %v961 = vpop.trf.xlu0
      %v962 = vpop.trf.xlu0
      %v963 = vpop.trf.xlu0
      %v964 = vpop.trf.xlu0
      %v965 = vpop.trf.xlu0
      %v966 = vpop.trf.xlu0
      %v967 = vpop.trf.xlu0
      %v968 = vpop.trf.xlu0
      %v969 = vpop.trf.xlu0
      %v970 = vpop.trf.xlu0
      %v971 = vpop.trf.xlu0
      %v972 = vpop.trf.xlu0
      %v973 = vpop.trf.xlu0
      %v974 = vpop.trf.xlu0
      %v975 = vpop.trf.xlu0
      %976 = vxpose.xlu0.b32.start [1/16] %v901, 128
      %977 = vxpose.xlu0.b32.cont [2/16] %v909, 128
      %978 = vxpose.xlu0.b32.cont [3/16] 0.0, 128
      %979 = vxpose.xlu0.b32.cont [4/16] 0.0, 128
      %980 = vxpose.xlu0.b32.cont [5/16] 0.0, 128
      %981 = vxpose.xlu0.b32.cont [6/16] 0.0, 128
      %982 = vxpose.xlu0.b32.cont [7/16] 0.0, 128
      %983 = vxpose.xlu0.b32.cont [8/16] 0.0, 128
      %984 = vxpose.xlu0.b32.cont [9/16] 0.0, 128
      %985 = vxpose.xlu0.b32.cont [10/16] 0.0, 128
      %986 = vxpose.xlu0.b32.cont [11/16] 0.0, 128
      %987 = vxpose.xlu0.b32.cont [12/16] 0.0, 128
      %988 = vxpose.xlu0.b32.cont [13/16] 0.0, 128
      %989 = vxpose.xlu0.b32.cont [14/16] 0.0, 128
      %990 = vxpose.xlu0.b32.cont [15/16] 0.0, 128
      %991 = vxpose.xlu0.b32.end [16/16] 0.0, 128
      %v992 = vpop.trf.xlu0
      %v993 = vpop.trf.xlu0
      %v994 = vpop.trf.xlu0
      %v995 = vpop.trf.xlu0
      %v996 = vpop.trf.xlu0
      %v997 = vpop.trf.xlu0
      %v998 = vpop.trf.xlu0
      %v999 = vpop.trf.xlu0
      %v1000 = vpop.trf.xlu0
      %v1001 = vpop.trf.xlu0
      %v1002 = vpop.trf.xlu0
      %v1003 = vpop.trf.xlu0
      %v1004 = vpop.trf.xlu0
      %v1005 = vpop.trf.xlu0
      %v1006 = vpop.trf.xlu0
      %v1007 = vpop.trf.xlu0
      %1008 = vxpose.xlu0.b32.start [1/16] %v903, 128
      %1009 = vxpose.xlu0.b32.cont [2/16] %v911, 128
      %1010 = vxpose.xlu0.b32.cont [3/16] 0.0, 128
      %1011 = vxpose.xlu0.b32.cont [4/16] 0.0, 128
      %1012 = vxpose.xlu0.b32.cont [5/16] 0.0, 128
      %1013 = vxpose.xlu0.b32.cont [6/16] 0.0, 128
      %1014 = vxpose.xlu0.b32.cont [7/16] 0.0, 128
      %1015 = vxpose.xlu0.b32.cont [8/16] 0.0, 128
      %1016 = vxpose.xlu0.b32.cont [9/16] 0.0, 128
      %1017 = vxpose.xlu0.b32.cont [10/16] 0.0, 128
      %1018 = vxpose.xlu0.b32.cont [11/16] 0.0, 128
      %1019 = vxpose.xlu0.b32.cont [12/16] 0.0, 128
      %1020 = vxpose.xlu0.b32.cont [13/16] 0.0, 128
      %1021 = vxpose.xlu0.b32.cont [14/16] 0.0, 128
      %1022 = vxpose.xlu0.b32.cont [15/16] 0.0, 128
      %1023 = vxpose.xlu0.b32.end [16/16] 0.0, 128
      %v1024 = vpop.trf.xlu0
      %v1025 = vpop.trf.xlu0
      %v1026 = vpop.trf.xlu0
      %v1027 = vpop.trf.xlu0
      %v1028 = vpop.trf.xlu0
      %v1029 = vpop.trf.xlu0
      %v1030 = vpop.trf.xlu0
      %v1031 = vpop.trf.xlu0
      %v1032 = vpop.trf.xlu0
      %v1033 = vpop.trf.xlu0
      %v1034 = vpop.trf.xlu0
      %v1035 = vpop.trf.xlu0
      %v1036 = vpop.trf.xlu0
      %v1037 = vpop.trf.xlu0
      %v1038 = vpop.trf.xlu0
      %v1039 = vpop.trf.xlu0
      %vm1040 = vcmask 130048
      %1041 = vst.msk [vmem:[%s172] sm:$0xff] %vm1040, %v928
      %1042 = vst.msk [vmem:[%s172 + $0x8] sm:$0xff] %vm1040, %v929
      %1043 = vst.msk [vmem:[%s172 + $0x10] sm:$0xff] %vm1040, %v930
      %1044 = vst.msk [vmem:[%s172 + $0x18] sm:$0xff] %vm1040, %v931
      %1045 = vst.msk [vmem:[%s172 + $0x20] sm:$0xff] %vm1040, %v932
      %1046 = vst.msk [vmem:[%s172 + $0x28] sm:$0xff] %vm1040, %v933
      %1047 = vst.msk [vmem:[%s172 + $0x30] sm:$0xff] %vm1040, %v934
      %1048 = vst.msk [vmem:[%s172 + $0x38] sm:$0xff] %vm1040, %v935
      %1049 = vst.msk [vmem:[%s172 + $0x40] sm:$0xff] %vm1040, %v936
      %1050 = vst.msk [vmem:[%s172 + $0x48] sm:$0xff] %vm1040, %v937
      %1051 = vst.msk [vmem:[%s172 + $0x50] sm:$0xff] %vm1040, %v938
      %1052 = vst.msk [vmem:[%s172 + $0x58] sm:$0xff] %vm1040, %v939
      %1053 = vst.msk [vmem:[%s172 + $0x60] sm:$0xff] %vm1040, %v940
      %1054 = vst.msk [vmem:[%s172 + $0x68] sm:$0xff] %vm1040, %v941
      %1055 = vst.msk [vmem:[%s172 + $0x70] sm:$0xff] %vm1040, %v942
      %1056 = vst.msk [vmem:[%s172 + $0x78] sm:$0xff] %vm1040, %v943
      %1057 = vst.msk [vmem:[%s172 + $0x80] sm:$0xff] %vm1040, %v960
      %1058 = vst.msk [vmem:[%s172 + $0x88] sm:$0xff] %vm1040, %v961
      %1059 = vst.msk [vmem:[%s172 + $0x90] sm:$0xff] %vm1040, %v962
      %1060 = vst.msk [vmem:[%s172 + $0x98] sm:$0xff] %vm1040, %v963
      %1061 = vst.msk [vmem:[%s172 + $0xa0] sm:$0xff] %vm1040, %v964
      %1062 = vst.msk [vmem:[%s172 + $0xa8] sm:$0xff] %vm1040, %v965
      %1063 = vst.msk [vmem:[%s172 + $0xb0] sm:$0xff] %vm1040, %v966
      %1064 = vst.msk [vmem:[%s172 + $0xb8] sm:$0xff] %vm1040, %v967
      %1065 = vst.msk [vmem:[%s172 + $0xc0] sm:$0xff] %vm1040, %v968
      %1066 = vst.msk [vmem:[%s172 + $0xc8] sm:$0xff] %vm1040, %v969
      %1067 = vst.msk [vmem:[%s172 + $0xd0] sm:$0xff] %vm1040, %v970
      %1068 = vst.msk [vmem:[%s172 + $0xd8] sm:$0xff] %vm1040, %v971
      %1069 = vst.msk [vmem:[%s172 + $0xe0] sm:$0xff] %vm1040, %v972
      %1070 = vst.msk [vmem:[%s172 + $0xe8] sm:$0xff] %vm1040, %v973
      %1071 = vst.msk [vmem:[%s172 + $0xf0] sm:$0xff] %vm1040, %v974
      %1072 = vst.msk [vmem:[%s172 + $0xf8] sm:$0xff] %vm1040, %v975
      %1073 = vst.msk [vmem:[%s172 + $0x100] sm:$0xff] %vm1040, %v992
      %1074 = vst.msk [vmem:[%s172 + $0x108] sm:$0xff] %vm1040, %v993
      %1075 = vst.msk [vmem:[%s172 + $0x110] sm:$0xff] %vm1040, %v994
      %1076 = vst.msk [vmem:[%s172 + $0x118] sm:$0xff] %vm1040, %v995
      %1077 = vst.msk [vmem:[%s172 + $0x120] sm:$0xff] %vm1040, %v996
      %1078 = vst.msk [vmem:[%s172 + $0x128] sm:$0xff] %vm1040, %v997
      %1079 = vst.msk [vmem:[%s172 + $0x130] sm:$0xff] %vm1040, %v998
      %1080 = vst.msk [vmem:[%s172 + $0x138] sm:$0xff] %vm1040, %v999
      %1081 = vst.msk [vmem:[%s172 + $0x140] sm:$0xff] %vm1040, %v1000
      %1082 = vst.msk [vmem:[%s172 + $0x148] sm:$0xff] %vm1040, %v1001
      %1083 = vst.msk [vmem:[%s172 + $0x150] sm:$0xff] %vm1040, %v1002
      %1084 = vst.msk [vmem:[%s172 + $0x158] sm:$0xff] %vm1040, %v1003
      %1085 = vst.msk [vmem:[%s172 + $0x160] sm:$0xff] %vm1040, %v1004
      %1086 = vst.msk [vmem:[%s172 + $0x168] sm:$0xff] %vm1040, %v1005
      %1087 = vst.msk [vmem:[%s172 + $0x170] sm:$0xff] %vm1040, %v1006
      %1088 = vst.msk [vmem:[%s172 + $0x178] sm:$0xff] %vm1040, %v1007
      %1089 = vst.msk [vmem:[%s172 + $0x180] sm:$0xff] %vm1040, %v1024
      %1090 = vst.msk [vmem:[%s172 + $0x188] sm:$0xff] %vm1040, %v1025
      %1091 = vst.msk [vmem:[%s172 + $0x190] sm:$0xff] %vm1040, %v1026
      %1092 = vst.msk [vmem:[%s172 + $0x198] sm:$0xff] %vm1040, %v1027
      %1093 = vst.msk [vmem:[%s172 + $0x1a0] sm:$0xff] %vm1040, %v1028
      %1094 = vst.msk [vmem:[%s172 + $0x1a8] sm:$0xff] %vm1040, %v1029
      %1095 = vst.msk [vmem:[%s172 + $0x1b0] sm:$0xff] %vm1040, %v1030
      %1096 = vst.msk [vmem:[%s172 + $0x1b8] sm:$0xff] %vm1040, %v1031
      %1097 = vst.msk [vmem:[%s172 + $0x1c0] sm:$0xff] %vm1040, %v1032
      %1098 = vst.msk [vmem:[%s172 + $0x1c8] sm:$0xff] %vm1040, %v1033
      %1099 = vst.msk [vmem:[%s172 + $0x1d0] sm:$0xff] %vm1040, %v1034
      %1100 = vst.msk [vmem:[%s172 + $0x1d8] sm:$0xff] %vm1040, %v1035
      %1101 = vst.msk [vmem:[%s172 + $0x1e0] sm:$0xff] %vm1040, %v1036
      %1102 = vst.msk [vmem:[%s172 + $0x1e8] sm:$0xff] %vm1040, %v1037
      %1103 = vst.msk [vmem:[%s172 + $0x1f0] sm:$0xff] %vm1040, %v1038
      %1104 = vst.msk [vmem:[%s172 + $0x1f8] sm:$0xff] %vm1040, %v1039
      %s1105 = smul.u32 64, %s14
      %p1106 = scmp.lt.s32.totalorder %s1105, 127
      %s1107 = scalar_select %p1106, %s1105, 127
      %s1108 = smul.addr %s1107, 8
      %s1109 = scalar_lea.vmem %s3, %s1108
      // Predicated region
      $region33: #{tpu_custom_call.1} parent=31 // pred_check
        %p1110 = pneg %p100
      $region34: #{tpu_custom_call.1} parent=31 // pred_check_branch
        %1112 = sbr.rel (%p1110) target = $region36
      $region35: #{tpu_custom_call.1} parent=31 // pred_region
        %s1113 = smul.u32 64, %s14
      $region36: #{tpu_custom_call.1} parent=31 // pred_fallthru
        _
    $region32: #{tpu_custom_call.1} parent=5 // pred_fallthru
      _
    %p1114 = scmp.le.s32.totalorder 2, %s9
    // Predicated region
    $region37: #{tpu_custom_call.1} parent=5 // pred_check
      %p1115 = pneg %p1114
    $region38: #{tpu_custom_call.1} parent=5 // pred_check_branch
      %1117 = sbr.rel (%p1115) target = $region40
    $region39: #{tpu_custom_call.1} parent=5 // pred_region
      %s1118 = ssub.s32 %s9, 2
      // Predicated region
      $region41: #{tpu_custom_call.1} parent=39 // pred_check
        %p1119 = pneg %p106
      $region42: #{tpu_custom_call.1} parent=39 // pred_check_branch
        %1121 = sbr.rel (%p1119) target = $region44
      $region43: #{tpu_custom_call.1} parent=39 // pred_region
        %s1122 = smul.u32 64, %s15
        %p1123 = scmp.lt.s32.totalorder %s1122, 127
        %s1124 = scalar_select %p1123, %s1122, 127
        %s1125 = smul.addr %s1124, 8
        %s1126 = scalar_lea.vmem %s3, %s1125
      $region44: #{tpu_custom_call.1} parent=39 // pred_fallthru
        _
    $region40: #{tpu_custom_call.1} parent=5 // pred_fallthru
      _
  $region6: #{tpu_custom_call.1} parent=0 // loop_footer
    %s13 = sadd.s32 1, %s9
  $region7: #{tpu_custom_call.1} parent=0 // loop_footer_branch
    %8 = sbr.rel target = $region3
  $region8: #{tpu_custom_call.1} parent=0 // loop_exit
    _

</llo_original>
